<compile_context>
chip_gen: v5e
topology: v5e:2x2
jax: 0.10.0
libtpu: 0.0.40
codegen_flags: <defaults>
</compile_context>

<pallas_src>
import jax
import jax.numpy as jnp
from jax.experimental import pallas as pl
from jax.experimental.pallas import tpu as pltpu

_LANE = 128      # TPU lane width: feature dims padded to a multiple of this
_SUBLANE = 8     # batch tiles must be a multiple of the sublane count


def _round_up(n: int, m: int) -> int:
    return ((n + m - 1) // m) * m


def _pad_to(a, shape):
    pads = [(0, t - s) for s, t in zip(a.shape, shape)]
    if all(p == (0, 0) for p in pads):
        return a
    return jnp.pad(a, pads)  # zero padding


def mlp_kernel(x_ref, w1_ref, b1_ref, w2_ref, b2_ref, o_ref):
    # Two lane-dense MXU matmuls + sigmoid/tanh (EUP), all operands in VMEM.
    x = x_ref[...]
    z1 = jnp.dot(x, w1_ref[...], preferred_element_type=jnp.float32) + b1_ref[...]
    h1 = jax.nn.sigmoid(z1)
    z2 = jnp.dot(h1, w2_ref[...], preferred_element_type=jnp.float32) + b2_ref[...]
    o_ref[...] = jnp.tanh(z2).astype(o_ref.dtype)


def network_forward(x, w1, b1, w2, b2, *, block_b: int = 512):
    """x: [B, in]; w1: [in, hidden]; b1: [1, hidden]; w2: [hidden, out]; b2: [1, out]."""
    B, in_num = x.shape
    hidden = w1.shape[1]
    out_num = w2.shape[1]

    # --- host-side padding for lane-dense, MXU-shaped tiles -----------------
    hidden_p = _round_up(hidden, _LANE)
    out_p = _round_up(out_num, _LANE)

    w1_p = _pad_to(w1, (in_num, hidden_p))        # extra hidden cols -> 0
    b1_p = _pad_to(b1, (1, hidden_p))
    w2_p = _pad_to(w2, (hidden_p, out_p))         # zero rows kill padded h1 units
    b2_p = _pad_to(b2, (1, out_p))

    # batch tile: largest multiple of 8 up to block_b; pad batch to a multiple
    tb = min(_round_up(block_b, _SUBLANE), _round_up(B, _SUBLANE))
    b_pad = _round_up(B, tb)
    x_p = _pad_to(x, (b_pad, in_num))

    grid = (pl.cdiv(b_pad, tb),)

    out_padded = pl.pallas_call(
        mlp_kernel,
        out_shape=jax.ShapeDtypeStruct((b_pad, out_p), jnp.float32),
        grid=grid,
        in_specs=[
            pl.BlockSpec((tb, in_num), lambda i: (i, 0)),        # batch-tiled x
            pl.BlockSpec((in_num, hidden_p), lambda i: (0, 0)),  # resident W1
            pl.BlockSpec((1, hidden_p), lambda i: (0, 0)),       # resident b1
            pl.BlockSpec((hidden_p, out_p), lambda i: (0, 0)),   # resident W2
            pl.BlockSpec((1, out_p), lambda i: (0, 0)),          # resident b2
        ],
        out_specs=pl.BlockSpec((tb, out_p), lambda i: (i, 0)),   # lane-dense store
        compiler_params=pltpu.CompilerParams(
            dimension_semantics=("parallel",),
        ),
    )(x_p, w1_p, b1_p, w2_p, b2_p)

    return out_padded[:B, :out_num]


def init_linear(key, fan_in, fan_out):
    # Matches torch.nn.Linear default init: U(-1/sqrt(fan_in), 1/sqrt(fan_in))
    kw, kb = jax.random.split(key)
    bound = 1.0 / jnp.sqrt(jnp.float32(fan_in))
    w = jax.random.uniform(kw, (fan_in, fan_out), jnp.float32, -bound, bound)
    b = jax.random.uniform(kb, (1, fan_out), jnp.float32, -bound, bound)
    return w, b


def _reference(x, w1, b1, w2, b2):
    return jnp.tanh(jax.nn.sigmoid(x @ w1 + b1) @ w2 + b2)


if __name__ == "__main__":
    # Small shapes consistent with the XOR module.
    batch, in_num, hidden_num, out_num = 8, 2, 32, 1
    # hidden2_num == hidden_num (required for forward to type-check); hidden2_layer unused.

    key = jax.random.PRNGKey(0)
    k_x, k_l1, k_l2, k_x2 = jax.random.split(key, 4)

    x = jax.random.normal(k_x, (batch, in_num), jnp.float32)
    w1, b1 = init_linear(k_l1, in_num, hidden_num)
    w2, b2 = init_linear(k_l2, hidden_num, out_num)

    out = jax.block_until_ready(network_forward(x, w1, b1, w2, b2))
    ref = _reference(x, w1, b1, w2, b2)
    assert out.shape == (batch, out_num)
    assert jnp.allclose(out, ref, atol=1e-5, rtol=1e-5)

    # Second check: batch not a multiple of the tile -> exercises host padding
    # and multi-row-tile path.
    batch2 = 200
    x2 = jax.random.normal(k_x2, (batch2, in_num), jnp.float32)
    out2 = jax.block_until_ready(network_forward(x2, w1, b1, w2, b2, block_b=64))
    ref2 = _reference(x2, w1, b1, w2, b2)
    assert out2.shape == (batch2, out_num)
    assert jnp.allclose(out2, ref2, atol=1e-5, rtol=1e-5)

    print("KERNEL_OK")
</pallas_src>

<mosaic_0001>
module attributes {stable_mosaic.version = 11 : i64} {
  func.func @mlp_kernel(%arg0: i32, %arg1: memref<8x2xf32, #tpu.memory_space<vmem>>, %arg2: memref<2x128xf32, #tpu.memory_space<vmem>>, %arg3: memref<1x128xf32, #tpu.memory_space<vmem>>, %arg4: memref<128x128xf32, #tpu.memory_space<vmem>>, %arg5: memref<1x128xf32, #tpu.memory_space<vmem>>, %arg6: memref<8x128xf32, #tpu.memory_space<vmem>>) attributes {dimension_semantics = [#tpu.dimension_semantics<parallel>], iteration_bounds = array<i64: 1>, scalar_prefetch = 0 : i64, scratch_operands = 0 : i64, tpu.core_type = #tpu.core_type<tc>, window_params = [{transform_indices = @transform_0, window_bounds = array<i64: 8, 2>}, {pipeline_mode = #tpu.pipeline_mode<synchronous>, transform_indices = @transform_1, window_bounds = array<i64: 2, 128>}, {pipeline_mode = #tpu.pipeline_mode<synchronous>, transform_indices = @transform_2, window_bounds = array<i64: 1, 128>}, {pipeline_mode = #tpu.pipeline_mode<synchronous>, transform_indices = @transform_3, window_bounds = array<i64: 128, 128>}, {pipeline_mode = #tpu.pipeline_mode<synchronous>, transform_indices = @transform_4, window_bounds = array<i64: 1, 128>}, {transform_indices = @transform_5, window_bounds = array<i64: 8, 128>}]} {
    %c0 = arith.constant 0 : index
    %c0_0 = arith.constant 0 : index
    %0 = vector.load %arg1[%c0, %c0_0] : memref<8x2xf32, #tpu.memory_space<vmem>>, vector<8x2xf32>
    %c0_1 = arith.constant 0 : index
    %c0_2 = arith.constant 0 : index
    %1 = vector.load %arg2[%c0_1, %c0_2] : memref<2x128xf32, #tpu.memory_space<vmem>>, vector<2x128xf32>
    %cst = arith.constant dense<0.000000e+00> : vector<8x128xf32>
    %2 = tpu.matmul %0, %1, %cst {dimension_numbers = #tpu.dot_dimension_numbers<[1], [0], [0], [1], [0, 0, 1, 1], [], []>} : vector<8x2xf32>, vector<2x128xf32>, vector<8x128xf32> -> vector<8x128xf32>
    %c0_3 = arith.constant 0 : index
    %c0_4 = arith.constant 0 : index
    %3 = vector.load %arg3[%c0_3, %c0_4] : memref<1x128xf32, #tpu.memory_space<vmem>>, vector<1x128xf32>
    %4 = vector.broadcast %3 : vector<1x128xf32> to vector<8x128xf32>
    %5 = arith.addf %2, %4 : vector<8x128xf32>
    %6 = arith.negf %5 : vector<8x128xf32>
    %7 = math.exp %6 : vector<8x128xf32>
    %cst_5 = arith.constant 1.000000e+00 : f32
    %8 = vector.broadcast %cst_5 : f32 to vector<8x128xf32>
    %9 = arith.addf %8, %7 : vector<8x128xf32>
    %10 = arith.divf %8, %9 : vector<8x128xf32>
    %c0_6 = arith.constant 0 : index
    %c0_7 = arith.constant 0 : index
    %11 = vector.load %arg4[%c0_6, %c0_7] : memref<128x128xf32, #tpu.memory_space<vmem>>, vector<128x128xf32>
    %cst_8 = arith.constant dense<0.000000e+00> : vector<8x128xf32>
    %12 = tpu.matmul %10, %11, %cst_8 {dimension_numbers = #tpu.dot_dimension_numbers<[1], [0], [0], [1], [0, 0, 1, 1], [], []>} : vector<8x128xf32>, vector<128x128xf32>, vector<8x128xf32> -> vector<8x128xf32>
    %c0_9 = arith.constant 0 : index
    %c0_10 = arith.constant 0 : index
    %13 = vector.load %arg5[%c0_9, %c0_10] : memref<1x128xf32, #tpu.memory_space<vmem>>, vector<1x128xf32>
    %14 = vector.broadcast %13 : vector<1x128xf32> to vector<8x128xf32>
    %15 = arith.addf %12, %14 : vector<8x128xf32>
    %16 = math.tanh %15 : vector<8x128xf32>
    %c0_11 = arith.constant 0 : index
    %c0_12 = arith.constant 0 : index
    %17 = vector.load %arg6[%c0_11, %c0_12] : memref<8x128xf32, #tpu.memory_space<vmem>>, vector<8x128xf32>
    tpu.vector_store %arg6[%c0_11, %c0_12], %16 {strides = array<i32>} : memref<8x128xf32, #tpu.memory_space<vmem>>, vector<8x128xf32>,
    return
  }
  func.func @transform_0(%arg0: i32) -> (i32, i32) {
    %c0_i32 = arith.constant 0 : i32
    %c0_i32_0 = arith.constant 0 : i32
    return %arg0, %c0_i32 : i32, i32
  }
  func.func @transform_1(%arg0: i32) -> (i32, i32) {
    %c0_i32 = arith.constant 0 : i32
    %c0_i32_0 = arith.constant 0 : i32
    %c0_i32_1 = arith.constant 0 : i32
    return %c0_i32, %c0_i32_0 : i32, i32
  }
  func.func @transform_2(%arg0: i32) -> (i32, i32) {
    %c0_i32 = arith.constant 0 : i32
    %c0_i32_0 = arith.constant 0 : i32
    %c0_i32_1 = arith.constant 0 : i32
    return %c0_i32, %c0_i32_0 : i32, i32
  }
  func.func @transform_3(%arg0: i32) -> (i32, i32) {
    %c0_i32 = arith.constant 0 : i32
    %c0_i32_0 = arith.constant 0 : i32
    %c0_i32_1 = arith.constant 0 : i32
    return %c0_i32, %c0_i32_0 : i32, i32
  }
  func.func @transform_4(%arg0: i32) -> (i32, i32) {
    %c0_i32 = arith.constant 0 : i32
    %c0_i32_0 = arith.constant 0 : i32
    %c0_i32_1 = arith.constant 0 : i32
    return %c0_i32, %c0_i32_0 : i32, i32
  }
  func.func @transform_5(%arg0: i32) -> (i32, i32) {
    %c0_i32 = arith.constant 0 : i32
    %c0_i32_0 = arith.constant 0 : i32
    return %arg0, %c0_i32 : i32, i32
  }
}

</mosaic_0001>

<llo_original>
// kernel: tpu_custom_call.1
$region0: #{tpu_custom_call.1}
  #allocation0 [shape = 'u32[]', space=smem, size = 0x4, offset = 0x4, fixed_abs, tag = 'smem constant byte address 0x4 - core index']
  #allocation1 [shape = 'u32[72,128]{1,0:T(1,128)}', space=vmem, size = 0x9000, scoped, tag = 'internal scratch']
  %s0 = inlined_call_operand.vmem [shape: f32[8,2], index: 0, kind: input, shape index: {}]
  %s1 = inlined_call_operand.vmem [shape: f32[2,128], index: 1, kind: input, shape index: {}]
  %s2 = inlined_call_operand.vmem [shape: f32[1,128], index: 2, kind: input, shape index: {}]
  %s3 = inlined_call_operand.hbm [shape: f32[128,128], index: 3, kind: input, shape index: {}]
  %s4 = inlined_call_operand.vmem [shape: f32[1,128], index: 4, kind: input, shape index: {}]
  %s5 = inlined_call_operand.hbm [shape: f32[8,128], index: 5, kind: output, shape index: {}]
  %s6 = sld [smem:[#allocation0]]
  $region34: #{tpu_custom_call.1} parent=0
    _
  %s8 = ssub.s32 1, %s6
  %s9 = scalar_select 0, %s8, %s6
  $region1: #{tpu_custom_call.1} parent=0
    #allocation2 [shape = 'u8[65536]{0}', space=vmem, size = 0x10000, scoped, tag = 'input window, operand 3, single buffered']
    #allocation3 [shape = 's32[1]{0}', space=sflag, size = 0x4, scoped, tag = 'scoped memory for tpu_custom_call.1']
    #allocation4 [shape = 's32[1]{0}', space=sflag, size = 0x4, scoped, tag = 'scoped memory for tpu_custom_call.1']
    #allocation5 [shape = 'u8[4096]{0}', space=vmem, size = 0x1000, scoped, tag = 'output window, operand 0, single buffered']
    %10 = vsyncpa [#allocation3], 0
    %11 = vsyncpa [#allocation4], 0
    // Predicated region
    $region2: #{tpu_custom_call.1} parent=1 // pred_check
      _
    $region3: #{tpu_custom_call.1} parent=1 // pred_check_branch
      %13 = sbr.rel (0) target = $region5
    $region4: #{tpu_custom_call.1} parent=1 // pred_region
      _
    $region5: #{tpu_custom_call.1} parent=1 // pred_fallthru
      _
    // Predicated region
    $region6: #{tpu_custom_call.1} parent=1 // pred_check
      _
    $region7: #{tpu_custom_call.1} parent=1 // pred_check_branch
      %15 = sbr.rel (0) target = $region9
    $region8: #{tpu_custom_call.1} parent=1 // pred_region
      _
    $region9: #{tpu_custom_call.1} parent=1 // pred_fallthru
      _
    // Predicated region
    $region10: #{tpu_custom_call.1} parent=1 // pred_check
      _
    $region11: #{tpu_custom_call.1} parent=1 // pred_check_branch
      %17 = sbr.rel (0) target = $region13
    $region12: #{tpu_custom_call.1} parent=1 // pred_region
      _
    $region13: #{tpu_custom_call.1} parent=1 // pred_fallthru
      _
    // Predicated region
    $region14: #{tpu_custom_call.1} parent=1 // pred_check
      _
    $region15: #{tpu_custom_call.1} parent=1 // pred_check_branch
      %19 = sbr.rel (0) target = $region17
    $region16: #{tpu_custom_call.1} parent=1 // pred_region
      %21 = vsyncadd [#allocation3], 0
      %s22 = sshll.u32 %s3, 4
      %s23 = int_to_ptr.hbm [resolvable:$true] %s22
      %s24 = sshll.u32 [#allocation2], 4
      %s25 = int_to_ptr.vmem [resolvable:$true] %s24
      %30 = dma.hbm_to_vmem [thread:$0]  %s23, 2048, %s25, [#allocation3], 128, 128, 8
    $region17: #{tpu_custom_call.1} parent=1 // pred_fallthru
      _
    // Predicated region
    $region18: #{tpu_custom_call.1} parent=1 // pred_check
      _
    $region19: #{tpu_custom_call.1} parent=1 // pred_check_branch
      %32 = sbr.rel (0) target = $region21
    $region20: #{tpu_custom_call.1} parent=1 // pred_region
      _
    $region21: #{tpu_custom_call.1} parent=1 // pred_fallthru
      _
    // Predicated region
    $region22: #{tpu_custom_call.1} parent=1 // pred_check
      _
    $region23: #{tpu_custom_call.1} parent=1 // pred_check_branch
      %34 = sbr.rel (0) target = $region25
    $region24: #{tpu_custom_call.1} parent=1 // pred_region
      %36 = dma.done [#allocation3], 2048
    $region25: #{tpu_custom_call.1} parent=1 // pred_fallthru
      _
    %v37 = vld [vmem:[%s0] sm:$0xff]
    %v38 = vld [vmem:[%s1] sm:$0x3]
    %v39 = vld [vmem:[%s2] sm:$0x1]
    %v41 = vperm.slane %v39, 0
    %vm43 = vcmask 15360
    %v45 = vsel %vm43, %v37, 0
    %vm47 = vcmask 1041408
    %v49 = vsel %vm47, %v38, 0
    %51 = vmatpush.msra.mxu0 0.0
    %52 = vmatpush.msra.mxu0 0.0
    %53 = vmatpush.msra.mxu0 0.0
    %54 = vmatpush.msra.mxu0 0.0
    %55 = vmatpush.msra.mxu0 0.0
    %56 = vmatpush.msra.mxu0 0.0
    %57 = vmatpush.msra.mxu0 0.0
    %58 = vmatpush.msra.mxu0 0.0
    %59 = vmatpush.msra.mxu0 0.0
    %60 = vmatpush.msra.mxu0 0.0
    %61 = vmatpush.msra.mxu0 0.0
    %62 = vmatpush.msra.mxu0 0.0
    %63 = vmatpush.msra.mxu0 0.0
    %64 = vmatpush.msra.mxu0 0.0
    %65 = vmatpush.msra.mxu0 0.0
    %66 = vmatpush.msra.mxu0 %v49
    %67 = vmatmul.f32.gmra.mxu0 %v45
    %v68 = vpop.f32.mrf.mxu0
    %v69 = vadd.f32 %v41, %v68
    %70 = vdwg.mxu0
    %v71 = vxor.u32 %v69, 2147483648
    %v72 = vmul.f32 %v71, 1.442695
    %v73 = vpow.pop %v72
    %v74 = vadd.f32 %v73, 1.0
    %v75 = vrcp.pop %v74
    %v76 = vmul.f32 %v74, %v75
    %v77 = vsub.f32 1.0, %v76
    %v78 = vmul.f32 %v75, %v77
    %v79 = vadd.f32 %v75, %v78
    %vm80 = vweird.f32 %v74
    %vm81 = vweird.f32 %v75
    %vm82 = vmor %vm80, %vm81
    %v83 = vsel %vm82, %v75, %v79
    %v84 = vand.u32 2147483647, %v74
    %vm85 = vcmp.eq.f32.partialorder %v84, 8.507059e+37
    %v86 = vand.u32 %v74, 2147483648
    %v87 = vor.u32 1.1754944e-38, %v86
    %v88 = vsel %vm85, %v87, %v83
    %v89 = vmul.f32 1.0, %v88
    %v90 = vld [vmem:[#allocation2] sm:$0xff]
    %v91 = vld [vmem:[#allocation2 + $0x8] sm:$0xff]
    %v92 = vld [vmem:[#allocation2 + $0x10] sm:$0xff]
    %v93 = vld [vmem:[#allocation2 + $0x18] sm:$0xff]
    %v94 = vld [vmem:[#allocation2 + $0x20] sm:$0xff]
    %v95 = vld [vmem:[#allocation2 + $0x28] sm:$0xff]
    %v96 = vld [vmem:[#allocation2 + $0x30] sm:$0xff]
    %v97 = vld [vmem:[#allocation2 + $0x38] sm:$0xff]
    %v98 = vld [vmem:[#allocation2 + $0x40] sm:$0xff]
    %v99 = vld [vmem:[#allocation2 + $0x48] sm:$0xff]
    %v100 = vld [vmem:[#allocation2 + $0x50] sm:$0xff]
    %v101 = vld [vmem:[#allocation2 + $0x58] sm:$0xff]
    %v102 = vld [vmem:[#allocation2 + $0x60] sm:$0xff]
    %v103 = vld [vmem:[#allocation2 + $0x68] sm:$0xff]
    %v104 = vld [vmem:[#allocation2 + $0x70] sm:$0xff]
    %v105 = vld [vmem:[#allocation2 + $0x78] sm:$0xff]
    %v106 = vld [vmem:[%s4] sm:$0x1]
    %v108 = vperm.slane %v106, 0
    %110 = vmatpush.msra.mxu0 %v105
    %111 = vmatpush.msra.mxu0 %v104
    %112 = vmatpush.msra.mxu0 %v103
    %113 = vmatpush.msra.mxu0 %v102
    %114 = vmatpush.msra.mxu0 %v101
    %115 = vmatpush.msra.mxu0 %v100
    %116 = vmatpush.msra.mxu0 %v99
    %117 = vmatpush.msra.mxu0 %v98
    %118 = vmatpush.msra.mxu0 %v97
    %119 = vmatpush.msra.mxu0 %v96
    %120 = vmatpush.msra.mxu0 %v95
    %121 = vmatpush.msra.mxu0 %v94
    %122 = vmatpush.msra.mxu0 %v93
    %123 = vmatpush.msra.mxu0 %v92
    %124 = vmatpush.msra.mxu0 %v91
    %125 = vmatpush.msra.mxu0 %v90
    %126 = vmatmul.f32.gmra.mxu0 %v89
    %v127 = vpop.f32.mrf.mxu0
    %v128 = vadd.f32 %v108, %v127
    %129 = vdwg.mxu0
    %v130 = vtanh.pop %v128
    %131 = vst [vmem:[#allocation5] sm:$0xff] %v130
    // Predicated region
    $region26: #{tpu_custom_call.1} parent=1 // pred_check
      _
    $region27: #{tpu_custom_call.1} parent=1 // pred_check_branch
      %133 = sbr.rel (0) target = $region29
    $region28: #{tpu_custom_call.1} parent=1 // pred_region
      %135 = vsyncadd [#allocation4], 0
      %s137 = sshll.u32 [#allocation5], 4
      %s138 = int_to_ptr.vmem [resolvable:$true] %s137
      %s139 = sshll.u32 %s5, 4
      %s140 = int_to_ptr.hbm [resolvable:$true] %s139
      %142 = dma.vmem_to_hbm [thread:$0]  %s138, 128, %s140, [#allocation4]
    $region29: #{tpu_custom_call.1} parent=1 // pred_fallthru
      _
    // Predicated region
    $region30: #{tpu_custom_call.1} parent=1 // pred_check
      _
    $region31: #{tpu_custom_call.1} parent=1 // pred_check_branch
      %144 = sbr.rel (0) target = $region33
    $region32: #{tpu_custom_call.1} parent=1 // pred_region
      %146 = dma.done [#allocation4], 128
    $region33: #{tpu_custom_call.1} parent=1 // pred_fallthru
      _
    %147 = vsyncpa [#allocation3], 1
    %148 = vsyncpa [#allocation4], 1

</llo_original>
